<compile_context>
chip_gen: v7x
topology: tpu7x:2x2x1
jax: 0.10.0
libtpu: 0.0.40
codegen_flags: <defaults>
</compile_context>

<pallas_src>
import functools
import jax
import jax.numpy as jnp
from jax.experimental import pallas as pl
from jax.experimental.pallas import tpu as pltpu

_LANE = 128
_EPS = 1e-5  # PyTorch nn.LayerNorm default


def _round_up(n, m):
    return ((n + m - 1) // m) * m


def _layer_norm(h, gamma, beta, n_real):
    # One-pass stats.  Pad lanes of h are exact zeros (zero-padded weights and
    # biases), so sums over the padded width equal sums over the real width;
    # divide by the true feature count.  gamma/beta pad lanes are zero, so the
    # normalized pad lanes are forced back to zero.
    s = jnp.sum(h, axis=-1, keepdims=True)
    ss = jnp.sum(h * h, axis=-1, keepdims=True)
    mu = s * (1.0 / n_real)
    var = jnp.maximum(ss * (1.0 / n_real) - mu * mu, 0.0)
    inv = jax.lax.rsqrt(var + _EPS)
    return (h - mu) * inv * gamma + beta


def _mlp_kernel(xs_ref, xa_ref, w1s_ref, w1a_ref, w2_ref, w3_ref, vec_ref,
                o_ref, *, use_ln, f1, f2, f1p, f2p, doutp):
    """Fused 3-layer MLP (+ optional LayerNorm) for one batch tile."""
    cd = w2_ref.dtype  # MXU operand dtype (f32 or bf16); accumulation is f32.

    b1 = vec_ref[0:1, :f1p]
    b2 = vec_ref[1:2, :f2p]
    b3 = vec_ref[2:3, :doutp]

    # fc1 + ReLU — split matmul replaces the wrapper-level concat([s, a]).
    h = (jnp.dot(xs_ref[...].astype(cd), w1s_ref[...],
                 preferred_element_type=jnp.float32)
         + jnp.dot(xa_ref[...].astype(cd), w1a_ref[...],
                   preferred_element_type=jnp.float32)
         + b1)
    h = jnp.maximum(h, 0.0)
    if use_ln:
        h = _layer_norm(h, vec_ref[3:4, :f1p], vec_ref[4:5, :f1p], f1)

    # fc2 + ReLU
    h = jnp.dot(h.astype(cd), w2_ref[...],
                preferred_element_type=jnp.float32) + b2
    h = jnp.maximum(h, 0.0)
    if use_ln:
        h = _layer_norm(h, vec_ref[5:6, :f2p], vec_ref[6:7, :f2p], f2)

    # fc3 (no activation); lane-dense store into the padded output tile.
    out = jnp.dot(h.astype(cd), w3_ref[...],
                  preferred_element_type=jnp.float32) + b3
    o_ref[...] = out.astype(o_ref.dtype)


def prepare_params(params, state_dim, n_actions, *, compute_dtype=jnp.float32):
    """One-time (per set of weights) repacking: split fc1, pad feature dims to
    128 lanes, cast matmul operands to compute_dtype, and pack the 7 small
    vectors into a single (8, 128) f32 tile."""
    w1, b1, w2, b2, w3, b3, g1, be1, g2, be2 = params
    f1, f2, d_out = w1.shape[1], w2.shape[1], w3.shape[1]
    f1p, f2p, doutp = (_round_up(d, _LANE) for d in (f1, f2, d_out))
    fmax = max(f1p, f2p, doutp)

    def pad_mat(w, rows, cols):
        return jnp.pad(w, ((0, rows - w.shape[0]), (0, cols - w.shape[1])))

    w1s = pad_mat(w1[:state_dim], state_dim, f1p).astype(compute_dtype)
    w1a = pad_mat(w1[state_dim:state_dim + n_actions], n_actions,
                  f1p).astype(compute_dtype)
    w2p = pad_mat(w2, f1p, f2p).astype(compute_dtype)
    w3p = pad_mat(w3, f2p, doutp).astype(compute_dtype)

    def row(v, width):
        return jnp.pad(v.astype(jnp.float32),
                       (0, width - v.shape[0])).reshape(1, width)

    vec = jnp.concatenate([
        row(b1, fmax), row(b2, fmax), row(b3, fmax),
        row(g1, fmax), row(be1, fmax),
        row(g2, fmax), row(be2, fmax),
        jnp.zeros((1, fmax), jnp.float32),
    ], axis=0)  # (8, fmax) — a single aligned DMA

    return {"w1s": w1s, "w1a": w1a, "w2": w2p, "w3": w3p, "vec": vec,
            "dims": (f1, f2, d_out, f1p, f2p, doutp, fmax)}


def _choose_batch_tile(B):
    # Sublane-aligned tiles, preferring >=2 grid steps (megacore sharding).
    b8 = _round_up(B, 8)
    for tb in (1024, 512, 256, 128, 64, 32, 16, 8):
        if b8 >= 2 * tb:
            return tb
    return b8


def system_network_forward(state, action, prepped, *, use_ln=False,
                           batch_tile=None):
    """Pallas wrapper reproducing SystemNetwork.forward(state, action)."""
    B, ds = state.shape
    _, da = action.shape
    f1, f2, d_out, f1p, f2p, doutp, fmax = prepped["dims"]
    w1s, w1a, w2, w3, vec = (prepped[k] for k in ("w1s", "w1a", "w2", "w3", "vec"))
    cd_size = jnp.dtype(w2.dtype).itemsize

    tb = batch_tile if batch_tile is not None else _choose_batch_tile(B)
    Bp = _round_up(B, tb)
    if Bp != B:  # zero-pad the batch so every grid tile is full.
        state = jnp.pad(state, ((0, Bp - B), (0, 0)))
        action = jnp.pad(action, ((0, Bp - B), (0, 0)))

    # Rough VMEM budget: double-buffered I/O + weights + live activations.
    vmem_est = 2 * 4 * tb * (ds + da + doutp)
    vmem_est += 2 * cd_size * (ds * f1p + da * f1p + f1p * f2p + f2p * doutp)
    vmem_est += 2 * 4 * 8 * fmax
    vmem_est += 4 * tb * (f1p + f2p)
    vmem_limit = int(min(64 * 2 ** 20, max(2 * vmem_est, 32 * 2 ** 20)))

    kernel = functools.partial(_mlp_kernel, use_ln=use_ln, f1=f1, f2=f2,
                               f1p=f1p, f2p=f2p, doutp=doutp)
    full = lambda shape: pl.BlockSpec(shape, lambda i: (0, 0))

    out_padded = pl.pallas_call(
        kernel,
        out_shape=jax.ShapeDtypeStruct((Bp, doutp), state.dtype),
        grid_spec=pltpu.PrefetchScalarGridSpec(
            num_scalar_prefetch=0,
            grid=(Bp // tb,),
            in_specs=[
                pl.BlockSpec((tb, ds), lambda i: (i, 0)),   # state tile
                pl.BlockSpec((tb, da), lambda i: (i, 0)),   # action tile
                full((ds, f1p)), full((da, f1p)),           # fc1 (split)
                full((f1p, f2p)), full((f2p, doutp)),       # fc2, fc3
                full((8, fmax)),                            # packed vectors
            ],
            out_specs=pl.BlockSpec((tb, doutp), lambda i: (i, 0)),
        ),
        compiler_params=pltpu.CompilerParams(
            dimension_semantics=("parallel",),
            vmem_limit_bytes=vmem_limit),
    )(state, action, w1s, w1a, w2, w3, vec)

    # Kernel wrote a lane-dense (tb, doutp) tile; drop pad rows / lanes.
    return out_padded[:B, :d_out]


def init_params(key, state_dim, n_actions, fc1_dims, fc2_dims):
    """Deterministic init matching PyTorch nn.Linear defaults."""
    def linear(k, fan_in, fan_out):
        kw, kb = jax.random.split(k)
        bound = 1.0 / jnp.sqrt(fan_in)
        w = jax.random.uniform(kw, (fan_in, fan_out), jnp.float32, -bound, bound)
        b = jax.random.uniform(kb, (fan_out,), jnp.float32, -bound, bound)
        return w, b

    k1, k2, k3 = jax.random.split(key, 3)
    w1, b1 = linear(k1, state_dim + n_actions, fc1_dims)
    w2, b2 = linear(k2, fc1_dims, fc2_dims)
    w3, b3 = linear(k3, fc2_dims, state_dim)
    g1, be1 = jnp.ones((fc1_dims,), jnp.float32), jnp.zeros((fc1_dims,), jnp.float32)
    g2, be2 = jnp.ones((fc2_dims,), jnp.float32), jnp.zeros((fc2_dims,), jnp.float32)
    return (w1, b1, w2, b2, w3, b3, g1, be1, g2, be2)


def _reference(state, action, params, use_ln, compute_dtype=jnp.float32):
    w1, b1, w2, b2, w3, b3, g1, be1, g2, be2 = params
    cd = compute_dtype
    xa = jnp.concatenate([state, action], axis=1)
    h = jnp.dot(xa.astype(cd), w1.astype(cd),
                preferred_element_type=jnp.float32) + b1
    h = jnp.maximum(h, 0.0)
    if use_ln:
        mu = h.mean(-1, keepdims=True)
        var = ((h - mu) ** 2).mean(-1, keepdims=True)
        h = (h - mu) / jnp.sqrt(var + _EPS) * g1 + be1
    h = jnp.dot(h.astype(cd), w2.astype(cd),
                preferred_element_type=jnp.float32) + b2
    h = jnp.maximum(h, 0.0)
    if use_ln:
        mu = h.mean(-1, keepdims=True)
        var = ((h - mu) ** 2).mean(-1, keepdims=True)
        h = (h - mu) / jnp.sqrt(var + _EPS) * g2 + be2
    return jnp.dot(h.astype(cd), w3.astype(cd),
                   preferred_element_type=jnp.float32) + b3


if __name__ == "__main__":
    key = jax.random.PRNGKey(0)
    kp, ks, ka = jax.random.split(key, 3)

    # Shapes consistent with the module: input_dims=[16], n_actions=4,
    # fc1_dims=32, fc2_dims=32; batch=256 -> 2 parallel grid steps.
    B, state_dim, n_actions, fc1_dims, fc2_dims = 256, 16, 4, 32, 32

    params = init_params(kp, state_dim, n_actions, fc1_dims, fc2_dims)
    state = jax.random.normal(ks, (B, state_dim), jnp.float32)
    action = jax.random.normal(ka, (B, n_actions), jnp.float32)

    ok = True
    for use_ln in (False, True):
        for cd, tol in ((jnp.float32, 2e-3), (jnp.bfloat16, 1.5e-2)):
            prepped = prepare_params(params, state_dim, n_actions,
                                     compute_dtype=cd)
            out = system_network_forward(state, action, prepped, use_ln=use_ln)
            out = jax.block_until_ready(out)
            ref = _reference(state, action, params, use_ln, compute_dtype=cd)
            good = (out.shape == (B, state_dim)
                    and bool(jnp.allclose(out, ref, atol=tol, rtol=tol)))
            ok = ok and good

    if ok:
        print("KERNEL_OK")
</pallas_src>

<mosaic_0001>
module attributes {stable_mosaic.version = 11 : i64} {
  func.func @_mlp_kernel(%arg0: i32, %arg1: memref<128x16xf32, #tpu.memory_space<vmem>>, %arg2: memref<128x4xf32, #tpu.memory_space<vmem>>, %arg3: memref<16x128xf32, #tpu.memory_space<vmem>>, %arg4: memref<4x128xf32, #tpu.memory_space<vmem>>, %arg5: memref<128x128xf32, #tpu.memory_space<vmem>>, %arg6: memref<128x128xf32, #tpu.memory_space<vmem>>, %arg7: memref<8x128xf32, #tpu.memory_space<vmem>>, %arg8: memref<128x128xf32, #tpu.memory_space<vmem>>) attributes {dimension_semantics = [#tpu.dimension_semantics<parallel>], iteration_bounds = array<i64: 2>, scalar_prefetch = 0 : i64, scratch_operands = 0 : i64, tpu.core_type = #tpu.core_type<tc>, window_params = [{transform_indices = @transform_0, window_bounds = array<i64: 128, 16>}, {transform_indices = @transform_1, window_bounds = array<i64: 128, 4>}, {pipeline_mode = #tpu.pipeline_mode<synchronous>, transform_indices = @transform_2, window_bounds = array<i64: 16, 128>}, {pipeline_mode = #tpu.pipeline_mode<synchronous>, transform_indices = @transform_3, window_bounds = array<i64: 4, 128>}, {pipeline_mode = #tpu.pipeline_mode<synchronous>, transform_indices = @transform_4, window_bounds = array<i64: 128, 128>}, {pipeline_mode = #tpu.pipeline_mode<synchronous>, transform_indices = @transform_5, window_bounds = array<i64: 128, 128>}, {pipeline_mode = #tpu.pipeline_mode<synchronous>, transform_indices = @transform_6, window_bounds = array<i64: 8, 128>}, {transform_indices = @transform_7, window_bounds = array<i64: 128, 128>}]} {
    %c0 = arith.constant 0 : index
    %c0_0 = arith.constant 0 : index
    %0 = vector.load %arg7[%c0, %c0_0] : memref<8x128xf32, #tpu.memory_space<vmem>>, vector<1x128xf32>
    %c1 = arith.constant 1 : index
    %c0_1 = arith.constant 0 : index
    %1 = vector.load %arg7[%c1, %c0_1] : memref<8x128xf32, #tpu.memory_space<vmem>>, vector<1x128xf32>
    %c2 = arith.constant 2 : index
    %c0_2 = arith.constant 0 : index
    %2 = vector.load %arg7[%c2, %c0_2] : memref<8x128xf32, #tpu.memory_space<vmem>>, vector<1x128xf32>
    %c0_3 = arith.constant 0 : index
    %c0_4 = arith.constant 0 : index
    %3 = vector.load %arg1[%c0_3, %c0_4] : memref<128x16xf32, #tpu.memory_space<vmem>>, vector<128x16xf32>
    %c0_5 = arith.constant 0 : index
    %c0_6 = arith.constant 0 : index
    %4 = vector.load %arg3[%c0_5, %c0_6] : memref<16x128xf32, #tpu.memory_space<vmem>>, vector<16x128xf32>
    %cst = arith.constant dense<0.000000e+00> : vector<128x128xf32>
    %5 = tpu.matmul %3, %4, %cst {dimension_numbers = #tpu.dot_dimension_numbers<[1], [0], [0], [1], [0, 0, 1, 1], [], []>} : vector<128x16xf32>, vector<16x128xf32>, vector<128x128xf32> -> vector<128x128xf32>
    %c0_7 = arith.constant 0 : index
    %c0_8 = arith.constant 0 : index
    %6 = vector.load %arg2[%c0_7, %c0_8] : memref<128x4xf32, #tpu.memory_space<vmem>>, vector<128x4xf32>
    %c0_9 = arith.constant 0 : index
    %c0_10 = arith.constant 0 : index
    %7 = vector.load %arg4[%c0_9, %c0_10] : memref<4x128xf32, #tpu.memory_space<vmem>>, vector<4x128xf32>
    %cst_11 = arith.constant dense<0.000000e+00> : vector<128x128xf32>
    %8 = tpu.matmul %6, %7, %cst_11 {dimension_numbers = #tpu.dot_dimension_numbers<[1], [0], [0], [1], [0, 0, 1, 1], [], []>} : vector<128x4xf32>, vector<4x128xf32>, vector<128x128xf32> -> vector<128x128xf32>
    %9 = arith.addf %5, %8 : vector<128x128xf32>
    %10 = vector.broadcast %0 : vector<1x128xf32> to vector<128x128xf32>
    %11 = arith.addf %9, %10 : vector<128x128xf32>
    %cst_12 = arith.constant 0.000000e+00 : f32
    %12 = vector.broadcast %cst_12 : f32 to vector<128x128xf32>
    %13 = arith.maximumf %11, %12 : vector<128x128xf32>
    %c0_13 = arith.constant 0 : index
    %c0_14 = arith.constant 0 : index
    %14 = vector.load %arg5[%c0_13, %c0_14] : memref<128x128xf32, #tpu.memory_space<vmem>>, vector<128x128xf32>
    %cst_15 = arith.constant dense<0.000000e+00> : vector<128x128xf32>
    %15 = tpu.matmul %13, %14, %cst_15 {dimension_numbers = #tpu.dot_dimension_numbers<[1], [0], [0], [1], [0, 0, 1, 1], [], []>} : vector<128x128xf32>, vector<128x128xf32>, vector<128x128xf32> -> vector<128x128xf32>
    %16 = vector.broadcast %1 : vector<1x128xf32> to vector<128x128xf32>
    %17 = arith.addf %15, %16 : vector<128x128xf32>
    %cst_16 = arith.constant 0.000000e+00 : f32
    %18 = vector.broadcast %cst_16 : f32 to vector<128x128xf32>
    %19 = arith.maximumf %17, %18 : vector<128x128xf32>
    %c0_17 = arith.constant 0 : index
    %c0_18 = arith.constant 0 : index
    %20 = vector.load %arg6[%c0_17, %c0_18] : memref<128x128xf32, #tpu.memory_space<vmem>>, vector<128x128xf32>
    %cst_19 = arith.constant dense<0.000000e+00> : vector<128x128xf32>
    %21 = tpu.matmul %19, %20, %cst_19 {dimension_numbers = #tpu.dot_dimension_numbers<[1], [0], [0], [1], [0, 0, 1, 1], [], []>} : vector<128x128xf32>, vector<128x128xf32>, vector<128x128xf32> -> vector<128x128xf32>
    %22 = vector.broadcast %2 : vector<1x128xf32> to vector<128x128xf32>
    %23 = arith.addf %21, %22 : vector<128x128xf32>
    %c0_20 = arith.constant 0 : index
    %c0_21 = arith.constant 0 : index
    %24 = vector.load %arg8[%c0_20, %c0_21] : memref<128x128xf32, #tpu.memory_space<vmem>>, vector<128x128xf32>
    tpu.vector_store %arg8[%c0_20, %c0_21], %23 {strides = array<i32>} : memref<128x128xf32, #tpu.memory_space<vmem>>, vector<128x128xf32>,
    return
  }
  func.func @transform_0(%arg0: i32) -> (i32, i32) {
    %c0_i32 = arith.constant 0 : i32
    %c0_i32_0 = arith.constant 0 : i32
    return %arg0, %c0_i32 : i32, i32
  }
  func.func @transform_1(%arg0: i32) -> (i32, i32) {
    %c0_i32 = arith.constant 0 : i32
    %c0_i32_0 = arith.constant 0 : i32
    return %arg0, %c0_i32 : i32, i32
  }
  func.func @transform_2(%arg0: i32) -> (i32, i32) {
    %c0_i32 = arith.constant 0 : i32
    %c0_i32_0 = arith.constant 0 : i32
    %c0_i32_1 = arith.constant 0 : i32
    return %c0_i32, %c0_i32_0 : i32, i32
  }
  func.func @transform_3(%arg0: i32) -> (i32, i32) {
    %c0_i32 = arith.constant 0 : i32
    %c0_i32_0 = arith.constant 0 : i32
    %c0_i32_1 = arith.constant 0 : i32
    return %c0_i32, %c0_i32_0 : i32, i32
  }
  func.func @transform_4(%arg0: i32) -> (i32, i32) {
    %c0_i32 = arith.constant 0 : i32
    %c0_i32_0 = arith.constant 0 : i32
    %c0_i32_1 = arith.constant 0 : i32
    return %c0_i32, %c0_i32_0 : i32, i32
  }
  func.func @transform_5(%arg0: i32) -> (i32, i32) {
    %c0_i32 = arith.constant 0 : i32
    %c0_i32_0 = arith.constant 0 : i32
    %c0_i32_1 = arith.constant 0 : i32
    return %c0_i32, %c0_i32_0 : i32, i32
  }
  func.func @transform_6(%arg0: i32) -> (i32, i32) {
    %c0_i32 = arith.constant 0 : i32
    %c0_i32_0 = arith.constant 0 : i32
    %c0_i32_1 = arith.constant 0 : i32
    return %c0_i32, %c0_i32_0 : i32, i32
  }
  func.func @transform_7(%arg0: i32) -> (i32, i32) {
    %c0_i32 = arith.constant 0 : i32
    %c0_i32_0 = arith.constant 0 : i32
    return %arg0, %c0_i32 : i32, i32
  }
}

</mosaic_0001>

<llo_original>
// kernel: tpu_custom_call.1
$region0: #{tpu_custom_call.1}
  #allocation0 [shape = 'u32[]', space=smem, size = 0x4, offset = 0x4, fixed_abs, tag = 'smem constant byte address 0x4 - core index']
  #allocation1 [shape = 'u32[144,128]{1,0:T(1,128)}', space=vmem, size = 0x12000, scoped, tag = 'internal scratch']
  %s0 = inlined_call_operand.vmem [shape: f32[256,16], index: 0, kind: input, shape index: {}]
  %s1 = inlined_call_operand.vmem [shape: f32[256,4], index: 1, kind: input, shape index: {}]
  %s2 = inlined_call_operand.vmem [shape: f32[16,128], index: 2, kind: input, shape index: {}]
  %s3 = inlined_call_operand.vmem [shape: f32[4,128], index: 3, kind: input, shape index: {}]
  %s4 = inlined_call_operand.vmem [shape: f32[128,128], index: 4, kind: input, shape index: {}]
  %s5 = inlined_call_operand.vmem [shape: f32[128,128], index: 5, kind: input, shape index: {}]
  %s6 = inlined_call_operand.vmem [shape: f32[8,128], index: 6, kind: input, shape index: {}]
  %s7 = inlined_call_operand.hbm [shape: f32[256,128], index: 7, kind: output, shape index: {}]
  %s8 = sld [smem:[#allocation0]]
  $region61: #{tpu_custom_call.1} parent=0
    _
  %s10 = ssub.s32 1, %s8
  %s11 = scalar_select 0, %s10, %s8
  $region1: #{tpu_custom_call.1} parent=0
    #allocation2 [shape = 'u8[131072]{0}', space=vmem, size = 0x20000, scoped, tag = 'output window, operand 0']
    #allocation3 [shape = 's32[2]{0}', space=sflag, size = 0x8, scoped, tag = 'scoped memory for tpu_custom_call.1']
    %12 = vsyncpa [#allocation3], 0
    %s13 = scalar_lea.sflag [#allocation3], 1
    %14 = vsyncpa %s13, 0
    loop: start=0, step=1, limit=4
    $region2: #{tpu_custom_call.1} parent=1 // loop_pre_header
      _
    $region3: #{tpu_custom_call.1} parent=1 // loop_header
      %s16 = sphi 0, %s20
      %p17 = scmp.ge.s32.totalorder %s16, 4
      %s26 = sphi 0, %s28
      %s29 = sphi 0, %s26
      %s30 = sphi 0, %s29
      %s46 = sphi 0, %s30
      %s52 = sphi 0, %s54
      %s55 = sphi 0, %s52
      %s56 = sphi 0, %s55
      %s72 = sphi 0, %s56
      %s76 = sphi 0, %s76
      %s78 = sphi 0, %s76
      %s79 = sphi 0, %s78
      %s93 = sphi 0, %s79
      %s97 = sphi 0, %s97
      %s99 = sphi 0, %s97
      %s100 = sphi 0, %s99
      %s114 = sphi 0, %s100
      %s118 = sphi 0, %s118
      %s120 = sphi 0, %s118
      %s121 = sphi 0, %s120
      %s135 = sphi 0, %s121
      %s139 = sphi 0, %s139
      %s141 = sphi 0, %s139
      %s142 = sphi 0, %s141
      %s156 = sphi 0, %s142
      %s160 = sphi 0, %s160
      %s162 = sphi 0, %s160
      %s163 = sphi 0, %s162
      %s177 = sphi 0, %s163
      %s183 = sphi 0, %s185
      %s186 = sphi 0, %s183
      %s187 = sphi 0, %s186
      %s203 = sphi 0, %s187
    $region4: #{tpu_custom_call.1} parent=1 // loop_header_branch
      %19 = sbr.rel (%p17) target = $region8
    $region5: #{tpu_custom_call.1} parent=1 // loop_body
      %s21 = ssub.s32 %s16, 1
      %s22 = ssub.s32 %s16, 2
      %s23 = sadd.s32 %s16, 1
      %s24 = ssub.s32 %s16, %s23
      %p25 = scmp.eq.s32.totalorder %s24, 0
      %s27 = sadd.s32 %s26, 1
      %s28 = scalar_select %p25, %s26, %s27
      %p31 = pneg %p25
      %p32 = scmp.eq.s32.totalorder %s16, 1
      %p33 = por %p31, %p32
      %p34 = scmp.ne.s32.totalorder %s26, %s29
      %p35 = scmp.eq.s32.totalorder %s16, 0
      %p36 = por %p34, %p35
      %p37 = scmp.ne.s32.totalorder %s26, %s29
      %p38 = scmp.eq.s32.totalorder %s21, 1
      %p39 = por %p37, %p38
      %p40 = scmp.ne.s32.totalorder %s29, %s30
      %p41 = scmp.eq.s32.totalorder %s21, 0
      %p42 = por %p40, %p41
      %p43 = scmp.ne.s32.totalorder %s29, %s30
      %p44 = scmp.eq.s32.totalorder %s22, 1
      %p45 = por %p43, %p44
      %p47 = scmp.ne.s32.totalorder %s30, %s46
      %p48 = scmp.eq.s32.totalorder %s22, 0
      %p49 = por %p47, %p48
      %s50 = ssub.s32 %s16, %s23
      %p51 = scmp.eq.s32.totalorder %s50, 0
      %s53 = sadd.s32 %s52, 1
      %s54 = scalar_select %p51, %s52, %s53
      %p57 = pneg %p51
      %p58 = scmp.eq.s32.totalorder %s16, 1
      %p59 = por %p57, %p58
      %p60 = scmp.ne.s32.totalorder %s52, %s55
      %p61 = scmp.eq.s32.totalorder %s16, 0
      %p62 = por %p60, %p61
      %p63 = scmp.ne.s32.totalorder %s52, %s55
      %p64 = scmp.eq.s32.totalorder %s21, 1
      %p65 = por %p63, %p64
      %p66 = scmp.ne.s32.totalorder %s55, %s56
      %p67 = scmp.eq.s32.totalorder %s21, 0
      %p68 = por %p66, %p67
      %p69 = scmp.ne.s32.totalorder %s55, %s56
      %p70 = scmp.eq.s32.totalorder %s22, 1
      %p71 = por %p69, %p70
      %p73 = scmp.ne.s32.totalorder %s56, %s72
      %p74 = scmp.eq.s32.totalorder %s22, 0
      %p75 = por %p73, %p74
      %s77 = sadd.s32 %s76, 1
      %p80 = scmp.eq.s32.totalorder %s16, 1
      %p81 = scmp.ne.s32.totalorder %s76, %s78
      %p82 = scmp.eq.s32.totalorder %s16, 0
      %p83 = por %p81, %p82
      %p84 = scmp.ne.s32.totalorder %s76, %s78
      %p85 = scmp.eq.s32.totalorder %s21, 1
      %p86 = por %p84, %p85
      %p87 = scmp.ne.s32.totalorder %s78, %s79
      %p88 = scmp.eq.s32.totalorder %s21, 0
      %p89 = por %p87, %p88
      %p90 = scmp.ne.s32.totalorder %s78, %s79
      %p91 = scmp.eq.s32.totalorder %s22, 1
      %p92 = por %p90, %p91
      %p94 = scmp.ne.s32.totalorder %s79, %s93
      %p95 = scmp.eq.s32.totalorder %s22, 0
      %p96 = por %p94, %p95
      %s98 = sadd.s32 %s97, 1
      %p101 = scmp.eq.s32.totalorder %s16, 1
      %p102 = scmp.ne.s32.totalorder %s97, %s99
      %p103 = scmp.eq.s32.totalorder %s16, 0
      %p104 = por %p102, %p103
      %p105 = scmp.ne.s32.totalorder %s97, %s99
      %p106 = scmp.eq.s32.totalorder %s21, 1
      %p107 = por %p105, %p106
      %p108 = scmp.ne.s32.totalorder %s99, %s100
      %p109 = scmp.eq.s32.totalorder %s21, 0
      %p110 = por %p108, %p109
      %p111 = scmp.ne.s32.totalorder %s99, %s100
      %p112 = scmp.eq.s32.totalorder %s22, 1
      %p113 = por %p111, %p112
      %p115 = scmp.ne.s32.totalorder %s100, %s114
      %p116 = scmp.eq.s32.totalorder %s22, 0
      %p117 = por %p115, %p116
      %s119 = sadd.s32 %s118, 1
      %p122 = scmp.eq.s32.totalorder %s16, 1
      %p123 = scmp.ne.s32.totalorder %s118, %s120
      %p124 = scmp.eq.s32.totalorder %s16, 0
      %p125 = por %p123, %p124
      %p126 = scmp.ne.s32.totalorder %s118, %s120
      %p127 = scmp.eq.s32.totalorder %s21, 1
      %p128 = por %p126, %p127
      %p129 = scmp.ne.s32.totalorder %s120, %s121
      %p130 = scmp.eq.s32.totalorder %s21, 0
      %p131 = por %p129, %p130
      %p132 = scmp.ne.s32.totalorder %s120, %s121
      %p133 = scmp.eq.s32.totalorder %s22, 1
      %p134 = por %p132, %p133
      %p136 = scmp.ne.s32.totalorder %s121, %s135
      %p137 = scmp.eq.s32.totalorder %s22, 0
      %p138 = por %p136, %p137
      %s140 = sadd.s32 %s139, 1
      %p143 = scmp.eq.s32.totalorder %s16, 1
      %p144 = scmp.ne.s32.totalorder %s139, %s141
      %p145 = scmp.eq.s32.totalorder %s16, 0
      %p146 = por %p144, %p145
      %p147 = scmp.ne.s32.totalorder %s139, %s141
      %p148 = scmp.eq.s32.totalorder %s21, 1
      %p149 = por %p147, %p148
      %p150 = scmp.ne.s32.totalorder %s141, %s142
      %p151 = scmp.eq.s32.totalorder %s21, 0
      %p152 = por %p150, %p151
      %p153 = scmp.ne.s32.totalorder %s141, %s142
      %p154 = scmp.eq.s32.totalorder %s22, 1
      %p155 = por %p153, %p154
      %p157 = scmp.ne.s32.totalorder %s142, %s156
      %p158 = scmp.eq.s32.totalorder %s22, 0
      %p159 = por %p157, %p158
      %s161 = sadd.s32 %s160, 1
      %p164 = scmp.eq.s32.totalorder %s16, 1
      %p165 = scmp.ne.s32.totalorder %s160, %s162
      %p166 = scmp.eq.s32.totalorder %s16, 0
      %p167 = por %p165, %p166
      %p168 = scmp.ne.s32.totalorder %s160, %s162
      %p169 = scmp.eq.s32.totalorder %s21, 1
      %p170 = por %p168, %p169
      %p171 = scmp.ne.s32.totalorder %s162, %s163
      %p172 = scmp.eq.s32.totalorder %s21, 0
      %p173 = por %p171, %p172
      %p174 = scmp.ne.s32.totalorder %s162, %s163
      %p175 = scmp.eq.s32.totalorder %s22, 1
      %p176 = por %p174, %p175
      %p178 = scmp.ne.s32.totalorder %s163, %s177
      %p179 = scmp.eq.s32.totalorder %s22, 0
      %p180 = por %p178, %p179
      %s181 = ssub.s32 %s16, %s23
      %p182 = scmp.eq.s32.totalorder %s181, 0
      %s184 = sadd.s32 %s183, 1
      %s185 = scalar_select %p182, %s183, %s184
      %p188 = pneg %p182
      %p189 = scmp.eq.s32.totalorder %s16, 1
      %p190 = por %p188, %p189
      %p191 = scmp.ne.s32.totalorder %s183, %s186
      %p192 = scmp.eq.s32.totalorder %s16, 0
      %p193 = por %p191, %p192
      %p194 = scmp.ne.s32.totalorder %s183, %s186
      %p195 = scmp.eq.s32.totalorder %s21, 1
      %p196 = por %p194, %p195
      %p197 = scmp.ne.s32.totalorder %s186, %s187
      %p198 = scmp.eq.s32.totalorder %s21, 0
      %p199 = por %p197, %p198
      %p200 = scmp.ne.s32.totalorder %s186, %s187
      %p201 = scmp.eq.s32.totalorder %s22, 1
      %p202 = por %p200, %p201
      %p204 = scmp.ne.s32.totalorder %s187, %s203
      %p205 = scmp.eq.s32.totalorder %s22, 0
      %p206 = por %p204, %p205
      %p207 = scmp.le.s32.totalorder 1, %s16
      %p208 = scmp.lt.s32.totalorder %s16, 3
      %p209 = pnand %p207, %p208
      %p210 = pneg %p209
      // Predicated region
      $region9: #{tpu_custom_call.1} parent=5 // pred_check
        _
      $region10: #{tpu_custom_call.1} parent=5 // pred_check_branch
        %212 = sbr.rel (%p209) target = $region12
      $region11: #{tpu_custom_call.1} parent=5 // pred_region
        %s213 = ssub.s32 %s16, 1
        // Predicated region
        $region13: #{tpu_custom_call.1} parent=11 // pred_check
          %p214 = pneg %p89
        $region14: #{tpu_custom_call.1} parent=11 // pred_check_branch
          %216 = sbr.rel (%p214) target = $region16
        $region15: #{tpu_custom_call.1} parent=11 // pred_region
          _
        $region16: #{tpu_custom_call.1} parent=11 // pred_fallthru
          _
        // Predicated region
        $region17: #{tpu_custom_call.1} parent=11 // pred_check
          %p217 = pneg %p110
        $region18: #{tpu_custom_call.1} parent=11 // pred_check_branch
          %219 = sbr.rel (%p217) target = $region20
        $region19: #{tpu_custom_call.1} parent=11 // pred_region
          _
        $region20: #{tpu_custom_call.1} parent=11 // pred_fallthru
          _
        // Predicated region
        $region21: #{tpu_custom_call.1} parent=11 // pred_check
          %p220 = pneg %p131
        $region22: #{tpu_custom_call.1} parent=11 // pred_check_branch
          %222 = sbr.rel (%p220) target = $region24
        $region23: #{tpu_custom_call.1} parent=11 // pred_region
          _
        $region24: #{tpu_custom_call.1} parent=11 // pred_fallthru
          _
        // Predicated region
        $region25: #{tpu_custom_call.1} parent=11 // pred_check
          %p223 = pneg %p152
        $region26: #{tpu_custom_call.1} parent=11 // pred_check_branch
          %225 = sbr.rel (%p223) target = $region28
        $region27: #{tpu_custom_call.1} parent=11 // pred_region
          _
        $region28: #{tpu_custom_call.1} parent=11 // pred_fallthru
          _
        // Predicated region
        $region29: #{tpu_custom_call.1} parent=11 // pred_check
          %p226 = pneg %p173
        $region30: #{tpu_custom_call.1} parent=11 // pred_check_branch
          %228 = sbr.rel (%p226) target = $region32
        $region31: #{tpu_custom_call.1} parent=11 // pred_region
          _
        $region32: #{tpu_custom_call.1} parent=11 // pred_fallthru
          _
      $region12: #{tpu_custom_call.1} parent=5 // pred_fallthru
        _
      %p229 = scmp.lt.s32.totalorder %s16, 2
      // Predicated region
      $region33: #{tpu_custom_call.1} parent=5 // pred_check
        %p230 = pneg %p229
      $region34: #{tpu_custom_call.1} parent=5 // pred_check_branch
        %232 = sbr.rel (%p230) target = $region36
      $region35: #{tpu_custom_call.1} parent=5 // pred_region
        // Predicated region
        $region37: #{tpu_custom_call.1} parent=35 // pred_check
          %p233 = pneg %p36
        $region38: #{tpu_custom_call.1} parent=35 // pred_check_branch
          %235 = sbr.rel (%p233) target = $region40
        $region39: #{tpu_custom_call.1} parent=35 // pred_region
          %s236 = smul.u32 16, %s16
          %p237 = scmp.lt.s32.totalorder %s236, 31
          %s238 = scalar_select %p237, %s236, 31
          %s239 = smul.addr %s238, 8
          %s240 = scalar_lea.vmem %s0, %s239
          %s241 = smul.u32 16, %s16
        $region40: #{tpu_custom_call.1} parent=35 // pred_fallthru
          _
        // Predicated region
        $region41: #{tpu_custom_call.1} parent=35 // pred_check
          %p242 = pneg %p62
        $region42: #{tpu_custom_call.1} parent=35 // pred_check_branch
          %244 = sbr.rel (%p242) target = $region44
        $region43: #{tpu_custom_call.1} parent=35 // pred_region
          %s245 = smul.u32 16, %s16
          %p246 = scmp.lt.s32.totalorder %s245, 31
          %s247 = scalar_select %p246, %s245, 31
          %s248 = smul.addr %s247, 8
          %s249 = scalar_lea.vmem %s1, %s248
          %s250 = smul.u32 16, %s16
        $region44: #{tpu_custom_call.1} parent=35 // pred_fallthru
          _
      $region36: #{tpu_custom_call.1} parent=5 // pred_fallthru
        _
      %p251 = scmp.le.s32.totalorder 1, %s16
      %p252 = scmp.lt.s32.totalorder %s16, 3
      %p253 = pnand %p251, %p252
      %p254 = pneg %p253
      // Predicated region
      $region45: #{tpu_custom_call.1} parent=5 // pred_check
        _
      $region46: #{tpu_custom_call.1} parent=5 // pred_check_branch
        %256 = sbr.rel (%p253) target = $region48
      $region47: #{tpu_custom_call.1} parent=5 // pred_region
        %s257 = ssub.s32 %s16, 1
        %s258 = smul.u32 16, %s21
        %p259 = scmp.lt.s32.totalorder %s258, 31
        %s260 = scalar_select %p259, %s258, 31
        %s261 = smul.addr %s260, 8
        %s262 = scalar_lea.vmem %s0, %s261
        %p263 = pneg %p42
        %p264 = pneg %p39
        %s265 = smul.u32 16, %s21
        %p266 = scmp.lt.s32.totalorder %s265, 31
        %s267 = scalar_select %p266, %s265, 31
        %s268 = smul.addr %s267, 8
        %s269 = scalar_lea.vmem %s1, %s268
        %p270 = pneg %p68
        %p271 = pneg %p65
        %p272 = pneg %p89
        %p273 = pneg %p86
        %p274 = pneg %p110
        %p275 = pneg %p107
        %p276 = pneg %p131
        %p277 = pneg %p128
        %p278 = pneg %p152
        %p279 = pneg %p149
        %p280 = pneg %p173
        %p281 = pneg %p170
        %p282 = pneg %p199
        %p283 = pneg %p196
        %s284 = sand.u32 %s186, 1
        %s285 = scalar_lea.sflag [#allocation3], %s284
        %s286 = sand.u32 %s186, 1
        %s287 = smul.addr %s286, 128
        %s288 = scalar_lea.vmem [#allocation2], %s287
        %s289 = smul.u32 16, %s21
        %p290 = scmp.lt.s32.totalorder %s289, 31
        %s291 = scalar_select %p290, %s289, 31
        %s292 = smul.addr %s291, 8
        %s293 = scalar_lea.vmem %s0, %s292
        %s294 = smul.u32 16, %s21
        %s295 = smul.u32 16, %s21
        %p296 = scmp.lt.s32.totalorder %s295, 31
        %s297 = scalar_select %p296, %s295, 31
        %s298 = smul.addr %s297, 8
        %s299 = scalar_lea.vmem %s1, %s298
        %s300 = smul.u32 16, %s21
        %s301 = smul.u32 16, %s21
        %v302 = vld [vmem:[%s6] sm:$0x1]
        %v303 = vld [vmem:[%s6 + $0x1] sm:$0x1]
        %v304 = vld [vmem:[%s6 + $0x2] sm:$0x1]
        %v305 = vld [vmem:[%s293] sm:$0xff]
        %v306 = vld [vmem:[%s293 + $0x8] sm:$0xff]
        %v307 = vld [vmem:[%s293 + $0x10] sm:$0xff]
        %v308 = vld [vmem:[%s293 + $0x18] sm:$0xff]
        %v309 = vld [vmem:[%s293 + $0x20] sm:$0xff]
        %v310 = vld [vmem:[%s293 + $0x28] sm:$0xff]
        %v311 = vld [vmem:[%s293 + $0x30] sm:$0xff]
        %v312 = vld [vmem:[%s293 + $0x38] sm:$0xff]
        %v313 = vld [vmem:[%s293 + $0x40] sm:$0xff]
        %v314 = vld [vmem:[%s293 + $0x48] sm:$0xff]
        %v315 = vld [vmem:[%s293 + $0x50] sm:$0xff]
        %v316 = vld [vmem:[%s293 + $0x58] sm:$0xff]
        %v317 = vld [vmem:[%s293 + $0x60] sm:$0xff]
        %v318 = vld [vmem:[%s293 + $0x68] sm:$0xff]
        %v319 = vld [vmem:[%s293 + $0x70] sm:$0xff]
        %v320 = vld [vmem:[%s293 + $0x78] sm:$0xff]
        %v321 = vld [vmem:[%s2] sm:$0xff]
        %v322 = vld [vmem:[%s2 + $0x8] sm:$0xff]
        %v323 = vld [vmem:[%s299] sm:$0xff]
        %v324 = vld [vmem:[%s299 + $0x8] sm:$0xff]
        %v325 = vld [vmem:[%s299 + $0x10] sm:$0xff]
        %v326 = vld [vmem:[%s299 + $0x18] sm:$0xff]
        %v327 = vld [vmem:[%s299 + $0x20] sm:$0xff]
        %v328 = vld [vmem:[%s299 + $0x28] sm:$0xff]
        %v329 = vld [vmem:[%s299 + $0x30] sm:$0xff]
        %v330 = vld [vmem:[%s299 + $0x38] sm:$0xff]
        %v331 = vld [vmem:[%s299 + $0x40] sm:$0xff]
        %v332 = vld [vmem:[%s299 + $0x48] sm:$0xff]
        %v333 = vld [vmem:[%s299 + $0x50] sm:$0xff]
        %v334 = vld [vmem:[%s299 + $0x58] sm:$0xff]
        %v335 = vld [vmem:[%s299 + $0x60] sm:$0xff]
        %v336 = vld [vmem:[%s299 + $0x68] sm:$0xff]
        %v337 = vld [vmem:[%s299 + $0x70] sm:$0xff]
        %v338 = vld [vmem:[%s299 + $0x78] sm:$0xff]
        %v339 = vld [vmem:[%s3] sm:$0xf]
        %vm340 = vcmask 31744
        %v342 = vsel %vm340, %v323, 0
        %v345 = vsel %vm340, %v324, 0
        %v348 = vsel %vm340, %v325, 0
        %v351 = vsel %vm340, %v326, 0
        %v354 = vsel %vm340, %v327, 0
        %v357 = vsel %vm340, %v328, 0
        %v360 = vsel %vm340, %v329, 0
        %v363 = vsel %vm340, %v330, 0
        %v366 = vsel %vm340, %v331, 0
        %v369 = vsel %vm340, %v332, 0
        %v372 = vsel %vm340, %v333, 0
        %v375 = vsel %vm340, %v334, 0
        %v378 = vsel %vm340, %v335, 0
        %v381 = vsel %vm340, %v336, 0
        %v384 = vsel %vm340, %v337, 0
        %v387 = vsel %vm340, %v338, 0
        %vm389 = vcmask 1043456
        %v391 = vsel %vm389, %v339, 0
        %393 = vmatprep.subr.mxu0 0.0
        %394 = vmatpush1.msra.mxu0 %v391
        %395 = vmatprep.subr.mxu0 0.0
        %396 = vmatpush1.msra.mxu0 0.0
        %397 = vmatprep.subr.mxu0 0.0
        %398 = vmatpush1.msra.mxu0 0.0
        %399 = vmatprep.subr.mxu0 0.0
        %400 = vmatpush1.msra.mxu0 0.0
        %401 = vmatprep.subr.mxu0 0.0
        %402 = vmatpush1.msra.mxu0 0.0
        %403 = vmatprep.subr.mxu0 0.0
        %404 = vmatpush1.msra.mxu0 0.0
        %405 = vmatprep.subr.mxu0 0.0
        %406 = vmatpush1.msra.mxu0 0.0
        %407 = vmatprep.subr.mxu0 0.0
        %408 = vmatpush1.msra.mxu0 0.0
        %409 = vmatprep.subr.mxu0 0.0
        %410 = vmatpush1.msra.mxu0 0.0
        %411 = vmatprep.subr.mxu0 0.0
        %412 = vmatpush1.msra.mxu0 0.0
        %413 = vmatprep.subr.mxu0 0.0
        %414 = vmatpush1.msra.mxu0 0.0
        %415 = vmatprep.subr.mxu0 0.0
        %416 = vmatpush1.msra.mxu0 0.0
        %417 = vmatprep.subr.mxu0 0.0
        %418 = vmatpush1.msra.mxu0 0.0
        %419 = vmatprep.subr.mxu0 0.0
        %420 = vmatpush1.msra.mxu0 0.0
        %421 = vmatprep.subr.mxu0 0.0
        %422 = vmatpush1.msra.mxu0 0.0
        %423 = vmatprep.subr.mxu0 0.0
        %424 = vmatpush1.msra.mxu0 0.0
        %425 = vmatprep.subr.mxu0 0.0
        %426 = vmatpush1.msra.mxu0 0.0
        %427 = vmatprep.subr.mxu0 0.0
        %428 = vmatpush1.msra.mxu0 0.0
        %429 = vmatprep.subr.mxu0 0.0
        %430 = vmatpush1.msra.mxu0 0.0
        %431 = vmatprep.subr.mxu0 0.0
        %432 = vmatpush1.msra.mxu0 0.0
        %433 = vmatprep.subr.mxu0 0.0
        %434 = vmatpush1.msra.mxu0 0.0
        %435 = vmatprep.subr.mxu0 0.0
        %436 = vmatpush1.msra.mxu0 0.0
        %437 = vmatprep.subr.mxu0 0.0
        %438 = vmatpush1.msra.mxu0 0.0
        %439 = vmatprep.subr.mxu0 0.0
        %440 = vmatpush1.msra.mxu0 0.0
        %441 = vmatprep.subr.mxu0 0.0
        %442 = vmatpush1.msra.mxu0 0.0
        %443 = vmatprep.subr.mxu0 0.0
        %444 = vmatpush1.msra.mxu0 0.0
        %445 = vmatprep.subr.mxu0 0.0
        %446 = vmatpush1.msra.mxu0 0.0
        %447 = vmatprep.subr.mxu0 0.0
        %448 = vmatpush1.msra.mxu0 0.0
        %449 = vmatprep.subr.mxu0 0.0
        %450 = vmatpush1.msra.mxu0 0.0
        %451 = vmatprep.subr.mxu0 0.0
        %452 = vmatpush1.msra.mxu0 0.0
        %453 = vmatprep.subr.mxu0 0.0
        %454 = vmatpush1.msra.mxu0 0.0
        %455 = vmatprep.subr.mxu0 0.0
        %456 = vmatpush1.msra.mxu0 0.0
        %457 = vmatprep.mubr.f32.mxu0 0.0
        %458 = vmatmul.mubr.f32.gmra.mrb[0].mxu0 %v342
        %v459 = vpop.f32.mrb[0].mxu0
        %v460 = vadd.f32 0.0, %v459
        %v461 = vpop.f32.mrb[0].mxu0
        %462 = vmatprep.mubr.f32.mxu0 0.0
        %463 = vmatmul.mubr.f32.gmra.mrb[0].mxu0 %v345
        %v464 = vpop.f32.mrb[0].mxu0
        %v465 = vadd.f32 0.0, %v464
        %v466 = vpop.f32.mrb[0].mxu0
        %467 = vmatprep.mubr.f32.mxu0 0.0
        %468 = vmatmul.mubr.f32.gmra.mrb[0].mxu0 %v348
        %v469 = vpop.f32.mrb[0].mxu0
        %v470 = vadd.f32 0.0, %v469
        %v471 = vpop.f32.mrb[0].mxu0
        %472 = vmatprep.mubr.f32.mxu0 0.0
        %473 = vmatmul.mubr.f32.gmra.mrb[0].mxu0 %v351
        %v474 = vpop.f32.mrb[0].mxu0
        %v475 = vadd.f32 0.0, %v474
        %v476 = vpop.f32.mrb[0].mxu0
        %477 = vmatprep.mubr.f32.mxu0 0.0
        %478 = vmatmul.mubr.f32.gmra.mrb[0].mxu0 %v354
        %v479 = vpop.f32.mrb[0].mxu0
        %v480 = vadd.f32 0.0, %v479
        %v481 = vpop.f32.mrb[0].mxu0
        %482 = vmatprep.mubr.f32.mxu0 0.0
        %483 = vmatmul.mubr.f32.gmra.mrb[0].mxu0 %v357
        %v484 = vpop.f32.mrb[0].mxu0
        %v485 = vadd.f32 0.0, %v484
        %v486 = vpop.f32.mrb[0].mxu0
        %487 = vmatprep.mubr.f32.mxu0 0.0
        %488 = vmatmul.mubr.f32.gmra.mrb[0].mxu0 %v360
        %v489 = vpop.f32.mrb[0].mxu0
        %v490 = vadd.f32 0.0, %v489
        %v491 = vpop.f32.mrb[0].mxu0
        %492 = vmatprep.mubr.f32.mxu0 0.0
        %493 = vmatmul.mubr.f32.gmra.mrb[0].mxu0 %v363
        %v494 = vpop.f32.mrb[0].mxu0
        %v495 = vadd.f32 0.0, %v494
        %v496 = vpop.f32.mrb[0].mxu0
        %497 = vmatprep.mubr.f32.mxu0 0.0
        %498 = vmatmul.mubr.f32.gmra.mrb[0].mxu0 %v366
        %v499 = vpop.f32.mrb[0].mxu0
        %v500 = vadd.f32 0.0, %v499
        %v501 = vpop.f32.mrb[0].mxu0
        %502 = vmatprep.mubr.f32.mxu0 0.0
        %503 = vmatmul.mubr.f32.gmra.mrb[0].mxu0 %v369
        %v504 = vpop.f32.mrb[0].mxu0
        %v505 = vadd.f32 0.0, %v504
        %v506 = vpop.f32.mrb[0].mxu0
        %507 = vmatprep.mubr.f32.mxu0 0.0
        %508 = vmatmul.mubr.f32.gmra.mrb[0].mxu0 %v372
        %v509 = vpop.f32.mrb[0].mxu0
        %v510 = vadd.f32 0.0, %v509
        %v511 = vpop.f32.mrb[0].mxu0
        %512 = vmatprep.mubr.f32.mxu0 0.0
        %513 = vmatmul.mubr.f32.gmra.mrb[0].mxu0 %v375
        %v514 = vpop.f32.mrb[0].mxu0
        %v515 = vadd.f32 0.0, %v514
        %v516 = vpop.f32.mrb[0].mxu0
        %517 = vmatprep.mubr.f32.mxu0 0.0
        %518 = vmatmul.mubr.f32.gmra.mrb[0].mxu0 %v378
        %v519 = vpop.f32.mrb[0].mxu0
        %v520 = vadd.f32 0.0, %v519
        %v521 = vpop.f32.mrb[0].mxu0
        %522 = vmatprep.mubr.f32.mxu0 0.0
        %523 = vmatmul.mubr.f32.gmra.mrb[0].mxu0 %v381
        %v524 = vpop.f32.mrb[0].mxu0
        %v525 = vadd.f32 0.0, %v524
        %v526 = vpop.f32.mrb[0].mxu0
        %527 = vmatprep.mubr.f32.mxu0 0.0
        %528 = vmatmul.mubr.f32.gmra.mrb[0].mxu0 %v384
        %v529 = vpop.f32.mrb[0].mxu0
        %v530 = vadd.f32 0.0, %v529
        %v531 = vpop.f32.mrb[0].mxu0
        %532 = vmatprep.mubr.f32.mxu0 0.0
        %533 = vmatmul.mubr.f32.gmra.mrb[0].mxu0 %v387
        %v534 = vpop.f32.mrb[0].mxu0
        %v535 = vadd.f32 0.0, %v534
        %v536 = vpop.f32.mrb[0].mxu0
        %537 = vdwg.mxu0
        %vm538 = vcmask 130048
        %v540 = vsel %vm538, %v305, 0
        %v543 = vsel %vm538, %v306, 0
        %v546 = vsel %vm538, %v307, 0
        %v549 = vsel %vm538, %v308, 0
        %v552 = vsel %vm538, %v309, 0
        %v555 = vsel %vm538, %v310, 0
        %v558 = vsel %vm538, %v311, 0
        %v561 = vsel %vm538, %v312, 0
        %v564 = vsel %vm538, %v313, 0
        %v567 = vsel %vm538, %v314, 0
        %v570 = vsel %vm538, %v315, 0
        %v573 = vsel %vm538, %v316, 0
        %v576 = vsel %vm538, %v317, 0
        %v579 = vsel %vm538, %v318, 0
        %v582 = vsel %vm538, %v319, 0
        %v585 = vsel %vm538, %v320, 0
        %587 = vmatprep.subr.mxu0 0.0
        %588 = vmatpush1.msra.mxu0 %v321
        %589 = vmatprep.subr.mxu0 0.0
        %590 = vmatpush1.msra.mxu0 %v322
        %591 = vmatprep.subr.mxu0 0.0
        %592 = vmatpush1.msra.mxu0 0.0
        %593 = vmatprep.subr.mxu0 0.0
        %594 = vmatpush1.msra.mxu0 0.0
        %595 = vmatprep.subr.mxu0 0.0
        %596 = vmatpush1.msra.mxu0 0.0
        %597 = vmatprep.subr.mxu0 0.0
        %598 = vmatpush1.msra.mxu0 0.0
        %599 = vmatprep.subr.mxu0 0.0
        %600 = vmatpush1.msra.mxu0 0.0
        %601 = vmatprep.subr.mxu0 0.0
        %602 = vmatpush1.msra.mxu0 0.0
        %603 = vmatprep.subr.mxu0 0.0
        %604 = vmatpush1.msra.mxu0 0.0
        %605 = vmatprep.subr.mxu0 0.0
        %606 = vmatpush1.msra.mxu0 0.0
        %607 = vmatprep.subr.mxu0 0.0
        %608 = vmatpush1.msra.mxu0 0.0
        %609 = vmatprep.subr.mxu0 0.0
        %610 = vmatpush1.msra.mxu0 0.0
        %611 = vmatprep.subr.mxu0 0.0
        %612 = vmatpush1.msra.mxu0 0.0
        %613 = vmatprep.subr.mxu0 0.0
        %614 = vmatpush1.msra.mxu0 0.0
        %615 = vmatprep.subr.mxu0 0.0
        %616 = vmatpush1.msra.mxu0 0.0
        %617 = vmatprep.subr.mxu0 0.0
        %618 = vmatpush1.msra.mxu0 0.0
        %619 = vmatprep.subr.mxu0 0.0
        %620 = vmatpush1.msra.mxu0 0.0
        %621 = vmatprep.subr.mxu0 0.0
        %622 = vmatpush1.msra.mxu0 0.0
        %623 = vmatprep.subr.mxu0 0.0
        %624 = vmatpush1.msra.mxu0 0.0
        %625 = vmatprep.subr.mxu0 0.0
        %626 = vmatpush1.msra.mxu0 0.0
        %627 = vmatprep.subr.mxu0 0.0
        %628 = vmatpush1.msra.mxu0 0.0
        %629 = vmatprep.subr.mxu0 0.0
        %630 = vmatpush1.msra.mxu0 0.0
        %631 = vmatprep.subr.mxu0 0.0
        %632 = vmatpush1.msra.mxu0 0.0
        %633 = vmatprep.subr.mxu0 0.0
        %634 = vmatpush1.msra.mxu0 0.0
        %635 = vmatprep.subr.mxu0 0.0
        %636 = vmatpush1.msra.mxu0 0.0
        %637 = vmatprep.subr.mxu0 0.0
        %638 = vmatpush1.msra.mxu0 0.0
        %639 = vmatprep.subr.mxu0 0.0
        %640 = vmatpush1.msra.mxu0 0.0
        %641 = vmatprep.subr.mxu0 0.0
        %642 = vmatpush1.msra.mxu0 0.0
        %643 = vmatprep.subr.mxu0 0.0
        %644 = vmatpush1.msra.mxu0 0.0
        %645 = vmatprep.subr.mxu0 0.0
        %646 = vmatpush1.msra.mxu0 0.0
        %647 = vmatprep.subr.mxu0 0.0
        %648 = vmatpush1.msra.mxu0 0.0
        %649 = vmatprep.subr.mxu0 0.0
        %650 = vmatpush1.msra.mxu0 0.0
        %651 = vmatprep.mubr.f32.mxu0 0.0
        %652 = vmatmul.mubr.f32.gmra.mrb[0].mxu0 %v540
        %v653 = vpop.f32.mrb[0].mxu0
        %v654 = vadd.f32 %v460, %v653
        %v655 = vpop.f32.mrb[0].mxu0
        %656 = vmatprep.mubr.f32.mxu0 0.0
        %657 = vmatmul.mubr.f32.gmra.mrb[0].mxu0 %v543
        %v658 = vpop.f32.mrb[0].mxu0
        %v659 = vadd.f32 %v465, %v658
        %v660 = vpop.f32.mrb[0].mxu0
        %661 = vmatprep.mubr.f32.mxu0 0.0
        %662 = vmatmul.mubr.f32.gmra.mrb[0].mxu0 %v546
        %v663 = vpop.f32.mrb[0].mxu0
        %v664 = vadd.f32 %v470, %v663
        %v665 = vpop.f32.mrb[0].mxu0
        %666 = vmatprep.mubr.f32.mxu0 0.0
        %667 = vmatmul.mubr.f32.gmra.mrb[0].mxu0 %v549
        %v668 = vpop.f32.mrb[0].mxu0
        %v669 = vadd.f32 %v475, %v668
        %v670 = vpop.f32.mrb[0].mxu0
        %671 = vmatprep.mubr.f32.mxu0 0.0
        %672 = vmatmul.mubr.f32.gmra.mrb[0].mxu0 %v552
        %v673 = vpop.f32.mrb[0].mxu0
        %v674 = vadd.f32 %v480, %v673
        %v675 = vpop.f32.mrb[0].mxu0
        %676 = vmatprep.mubr.f32.mxu0 0.0
        %677 = vmatmul.mubr.f32.gmra.mrb[0].mxu0 %v555
        %v678 = vpop.f32.mrb[0].mxu0
        %v679 = vadd.f32 %v485, %v678
        %v680 = vpop.f32.mrb[0].mxu0
        %681 = vmatprep.mubr.f32.mxu0 0.0
        %682 = vmatmul.mubr.f32.gmra.mrb[0].mxu0 %v558
        %v683 = vpop.f32.mrb[0].mxu0
        %v684 = vadd.f32 %v490, %v683
        %v685 = vpop.f32.mrb[0].mxu0
        %686 = vmatprep.mubr.f32.mxu0 0.0
        %687 = vmatmul.mubr.f32.gmra.mrb[0].mxu0 %v561
        %v688 = vpop.f32.mrb[0].mxu0
        %v689 = vadd.f32 %v495, %v688
        %v690 = vpop.f32.mrb[0].mxu0
        %691 = vmatprep.mubr.f32.mxu0 0.0
        %692 = vmatmul.mubr.f32.gmra.mrb[0].mxu0 %v564
        %v693 = vpop.f32.mrb[0].mxu0
        %v694 = vadd.f32 %v500, %v693
        %v695 = vpop.f32.mrb[0].mxu0
        %696 = vmatprep.mubr.f32.mxu0 0.0
        %697 = vmatmul.mubr.f32.gmra.mrb[0].mxu0 %v567
        %v698 = vpop.f32.mrb[0].mxu0
        %v699 = vadd.f32 %v505, %v698
        %v700 = vpop.f32.mrb[0].mxu0
        %701 = vmatprep.mubr.f32.mxu0 0.0
        %702 = vmatmul.mubr.f32.gmra.mrb[0].mxu0 %v570
        %v703 = vpop.f32.mrb[0].mxu0
        %v704 = vadd.f32 %v510, %v703
        %v705 = vpop.f32.mrb[0].mxu0
        %706 = vmatprep.mubr.f32.mxu0 0.0
        %707 = vmatmul.mubr.f32.gmra.mrb[0].mxu0 %v573
        %v708 = vpop.f32.mrb[0].mxu0
        %v709 = vadd.f32 %v515, %v708
        %v710 = vpop.f32.mrb[0].mxu0
        %711 = vmatprep.mubr.f32.mxu0 0.0
        %712 = vmatmul.mubr.f32.gmra.mrb[0].mxu0 %v576
        %v713 = vpop.f32.mrb[0].mxu0
        %v714 = vadd.f32 %v520, %v713
        %v715 = vpop.f32.mrb[0].mxu0
        %716 = vmatprep.mubr.f32.mxu0 0.0
        %717 = vmatmul.mubr.f32.gmra.mrb[0].mxu0 %v579
        %v718 = vpop.f32.mrb[0].mxu0
        %v719 = vadd.f32 %v525, %v718
        %v720 = vpop.f32.mrb[0].mxu0
        %721 = vmatprep.mubr.f32.mxu0 0.0
        %722 = vmatmul.mubr.f32.gmra.mrb[0].mxu0 %v582
        %v723 = vpop.f32.mrb[0].mxu0
        %v724 = vadd.f32 %v530, %v723
        %v725 = vpop.f32.mrb[0].mxu0
        %726 = vmatprep.mubr.f32.mxu0 0.0
        %727 = vmatmul.mubr.f32.gmra.mrb[0].mxu0 %v585
        %v728 = vpop.f32.mrb[0].mxu0
        %v729 = vadd.f32 %v535, %v728
        %v730 = vpop.f32.mrb[0].mxu0
        %731 = vdwg.mxu0
        %v732 = vlaneseq
        %v733 = vshrl.u32 %v732, 7
        %v734 = vsub.s32 0, %v733
        %v735 = vrot.slane %v302, %v734
        %v736 = vadd.f32 %v654, %v735
        %v737 = vadd.f32 %v659, %v735
        %v738 = vadd.f32 %v664, %v735
        %v739 = vadd.f32 %v669, %v735
        %v740 = vadd.f32 %v674, %v735
        %v741 = vadd.f32 %v679, %v735
        %v742 = vadd.f32 %v684, %v735
        %v743 = vadd.f32 %v689, %v735
        %v744 = vadd.f32 %v694, %v735
        %v745 = vadd.f32 %v699, %v735
        %v746 = vadd.f32 %v704, %v735
        %v747 = vadd.f32 %v709, %v735
        %v748 = vadd.f32 %v714, %v735
        %v749 = vadd.f32 %v719, %v735
        %v750 = vadd.f32 %v724, %v735
        %v751 = vadd.f32 %v729, %v735
        %v752 = vmax.f32 %v736, 0.0
        %v753 = vmax.f32 %v737, 0.0
        %v754 = vmax.f32 %v738, 0.0
        %v755 = vmax.f32 %v739, 0.0
        %v756 = vmax.f32 %v740, 0.0
        %v757 = vmax.f32 %v741, 0.0
        %v758 = vmax.f32 %v742, 0.0
        %v759 = vmax.f32 %v743, 0.0
        %v760 = vmax.f32 %v744, 0.0
        %v761 = vmax.f32 %v745, 0.0
        %v762 = vmax.f32 %v746, 0.0
        %v763 = vmax.f32 %v747, 0.0
        %v764 = vmax.f32 %v748, 0.0
        %v765 = vmax.f32 %v749, 0.0
        %v766 = vmax.f32 %v750, 0.0
        %v767 = vmax.f32 %v751, 0.0
        %v768 = vld [vmem:[%s4] sm:$0xff]
        %v769 = vld [vmem:[%s4 + $0x8] sm:$0xff]
        %v770 = vld [vmem:[%s4 + $0x10] sm:$0xff]
        %v771 = vld [vmem:[%s4 + $0x18] sm:$0xff]
        %v772 = vld [vmem:[%s4 + $0x20] sm:$0xff]
        %v773 = vld [vmem:[%s4 + $0x28] sm:$0xff]
        %v774 = vld [vmem:[%s4 + $0x30] sm:$0xff]
        %v775 = vld [vmem:[%s4 + $0x38] sm:$0xff]
        %v776 = vld [vmem:[%s4 + $0x40] sm:$0xff]
        %v777 = vld [vmem:[%s4 + $0x48] sm:$0xff]
        %v778 = vld [vmem:[%s4 + $0x50] sm:$0xff]
        %v779 = vld [vmem:[%s4 + $0x58] sm:$0xff]
        %v780 = vld [vmem:[%s4 + $0x60] sm:$0xff]
        %v781 = vld [vmem:[%s4 + $0x68] sm:$0xff]
        %v782 = vld [vmem:[%s4 + $0x70] sm:$0xff]
        %v783 = vld [vmem:[%s4 + $0x78] sm:$0xff]
        %v784 = vlaneseq
        %v785 = vshrl.u32 %v784, 7
        %v786 = vsub.s32 0, %v785
        %v787 = vrot.slane %v303, %v786
        %788 = vmatprep.subr.mxu0 0.0
        %789 = vmatpush1.msra.mxu0 %v768
        %790 = vmatprep.subr.mxu0 0.0
        %791 = vmatpush1.msra.mxu0 %v769
        %792 = vmatprep.subr.mxu0 0.0
        %793 = vmatpush1.msra.mxu0 %v770
        %794 = vmatprep.subr.mxu0 0.0
        %795 = vmatpush1.msra.mxu0 %v771
        %796 = vmatprep.subr.mxu0 0.0
        %797 = vmatpush1.msra.mxu0 %v772
        %798 = vmatprep.subr.mxu0 0.0
        %799 = vmatpush1.msra.mxu0 %v773
        %800 = vmatprep.subr.mxu0 0.0
        %801 = vmatpush1.msra.mxu0 %v774
        %802 = vmatprep.subr.mxu0 0.0
        %803 = vmatpush1.msra.mxu0 %v775
        %804 = vmatprep.subr.mxu0 0.0
        %805 = vmatpush1.msra.mxu0 %v776
        %806 = vmatprep.subr.mxu0 0.0
        %807 = vmatpush1.msra.mxu0 %v777
        %808 = vmatprep.subr.mxu0 0.0
        %809 = vmatpush1.msra.mxu0 %v778
        %810 = vmatprep.subr.mxu0 0.0
        %811 = vmatpush1.msra.mxu0 %v779
        %812 = vmatprep.subr.mxu0 0.0
        %813 = vmatpush1.msra.mxu0 %v780
        %814 = vmatprep.subr.mxu0 0.0
        %815 = vmatpush1.msra.mxu0 %v781
        %816 = vmatprep.subr.mxu0 0.0
        %817 = vmatpush1.msra.mxu0 %v782
        %818 = vmatprep.subr.mxu0 0.0
        %819 = vmatpush1.msra.mxu0 %v783
        %820 = vmatprep.subr.mxu0 0.0
        %821 = vmatpush1.msra.mxu0 0.0
        %822 = vmatprep.subr.mxu0 0.0
        %823 = vmatpush1.msra.mxu0 0.0
        %824 = vmatprep.subr.mxu0 0.0
        %825 = vmatpush1.msra.mxu0 0.0
        %826 = vmatprep.subr.mxu0 0.0
        %827 = vmatpush1.msra.mxu0 0.0
        %828 = vmatprep.subr.mxu0 0.0
        %829 = vmatpush1.msra.mxu0 0.0
        %830 = vmatprep.subr.mxu0 0.0
        %831 = vmatpush1.msra.mxu0 0.0
        %832 = vmatprep.subr.mxu0 0.0
        %833 = vmatpush1.msra.mxu0 0.0
        %834 = vmatprep.subr.mxu0 0.0
        %835 = vmatpush1.msra.mxu0 0.0
        %836 = vmatprep.subr.mxu0 0.0
        %837 = vmatpush1.msra.mxu0 0.0
        %838 = vmatprep.subr.mxu0 0.0
        %839 = vmatpush1.msra.mxu0 0.0
        %840 = vmatprep.subr.mxu0 0.0
        %841 = vmatpush1.msra.mxu0 0.0
        %842 = vmatprep.subr.mxu0 0.0
        %843 = vmatpush1.msra.mxu0 0.0
        %844 = vmatprep.subr.mxu0 0.0
        %845 = vmatpush1.msra.mxu0 0.0
        %846 = vmatprep.subr.mxu0 0.0
        %847 = vmatpush1.msra.mxu0 0.0
        %848 = vmatprep.subr.mxu0 0.0
        %849 = vmatpush1.msra.mxu0 0.0
        %850 = vmatprep.subr.mxu0 0.0
        %851 = vmatpush1.msra.mxu0 0.0
        %852 = vmatprep.mubr.f32.mxu0 0.0
        %853 = vmatmul.mubr.f32.gmra.mrb[0].mxu0 %v752
        %v854 = vpop.f32.mrb[0].mxu0
        %v855 = vadd.f32 %v787, %v854
        %v856 = vpop.f32.mrb[0].mxu0
        %857 = vmatprep.mubr.f32.mxu0 0.0
        %858 = vmatmul.mubr.f32.gmra.mrb[0].mxu0 %v753
        %v859 = vpop.f32.mrb[0].mxu0
        %v860 = vadd.f32 %v787, %v859
        %v861 = vpop.f32.mrb[0].mxu0
        %862 = vmatprep.mubr.f32.mxu0 0.0
        %863 = vmatmul.mubr.f32.gmra.mrb[0].mxu0 %v754
        %v864 = vpop.f32.mrb[0].mxu0
        %v865 = vadd.f32 %v787, %v864
        %v866 = vpop.f32.mrb[0].mxu0
        %867 = vmatprep.mubr.f32.mxu0 0.0
        %868 = vmatmul.mubr.f32.gmra.mrb[0].mxu0 %v755
        %v869 = vpop.f32.mrb[0].mxu0
        %v870 = vadd.f32 %v787, %v869
        %v871 = vpop.f32.mrb[0].mxu0
        %872 = vmatprep.mubr.f32.mxu0 0.0
        %873 = vmatmul.mubr.f32.gmra.mrb[0].mxu0 %v756
        %v874 = vpop.f32.mrb[0].mxu0
        %v875 = vadd.f32 %v787, %v874
        %v876 = vpop.f32.mrb[0].mxu0
        %877 = vmatprep.mubr.f32.mxu0 0.0
        %878 = vmatmul.mubr.f32.gmra.mrb[0].mxu0 %v757
        %v879 = vpop.f32.mrb[0].mxu0
        %v880 = vadd.f32 %v787, %v879
        %v881 = vpop.f32.mrb[0].mxu0
        %882 = vmatprep.mubr.f32.mxu0 0.0
        %883 = vmatmul.mubr.f32.gmra.mrb[0].mxu0 %v758
        %v884 = vpop.f32.mrb[0].mxu0
        %v885 = vadd.f32 %v787, %v884
        %v886 = vpop.f32.mrb[0].mxu0
        %887 = vmatprep.mubr.f32.mxu0 0.0
        %888 = vmatmul.mubr.f32.gmra.mrb[0].mxu0 %v759
        %v889 = vpop.f32.mrb[0].mxu0
        %v890 = vadd.f32 %v787, %v889
        %v891 = vpop.f32.mrb[0].mxu0
        %892 = vmatprep.mubr.f32.mxu0 0.0
        %893 = vmatmul.mubr.f32.gmra.mrb[0].mxu0 %v760
        %v894 = vpop.f32.mrb[0].mxu0
        %v895 = vadd.f32 %v787, %v894
        %v896 = vpop.f32.mrb[0].mxu0
        %897 = vmatprep.mubr.f32.mxu0 0.0
        %898 = vmatmul.mubr.f32.gmra.mrb[0].mxu0 %v761
        %v899 = vpop.f32.mrb[0].mxu0
        %v900 = vadd.f32 %v787, %v899
        %v901 = vpop.f32.mrb[0].mxu0
        %902 = vmatprep.mubr.f32.mxu0 0.0
        %903 = vmatmul.mubr.f32.gmra.mrb[0].mxu0 %v762
        %v904 = vpop.f32.mrb[0].mxu0
        %v905 = vadd.f32 %v787, %v904
        %v906 = vpop.f32.mrb[0].mxu0
        %907 = vmatprep.mubr.f32.mxu0 0.0
        %908 = vmatmul.mubr.f32.gmra.mrb[0].mxu0 %v763
        %v909 = vpop.f32.mrb[0].mxu0
        %v910 = vadd.f32 %v787, %v909
        %v911 = vpop.f32.mrb[0].mxu0
        %912 = vmatprep.mubr.f32.mxu0 0.0
        %913 = vmatmul.mubr.f32.gmra.mrb[0].mxu0 %v764
        %v914 = vpop.f32.mrb[0].mxu0
        %v915 = vadd.f32 %v787, %v914
        %v916 = vpop.f32.mrb[0].mxu0
        %917 = vmatprep.mubr.f32.mxu0 0.0
        %918 = vmatmul.mubr.f32.gmra.mrb[0].mxu0 %v765
        %v919 = vpop.f32.mrb[0].mxu0
        %v920 = vadd.f32 %v787, %v919
        %v921 = vpop.f32.mrb[0].mxu0
        %922 = vmatprep.mubr.f32.mxu0 0.0
        %923 = vmatmul.mubr.f32.gmra.mrb[0].mxu0 %v766
        %v924 = vpop.f32.mrb[0].mxu0
        %v925 = vadd.f32 %v787, %v924
        %v926 = vpop.f32.mrb[0].mxu0
        %927 = vmatprep.mubr.f32.mxu0 0.0
        %928 = vmatmul.mubr.f32.gmra.mrb[0].mxu0 %v767
        %v929 = vpop.f32.mrb[0].mxu0
        %v930 = vadd.f32 %v787, %v929
        %v931 = vpop.f32.mrb[0].mxu0
        %932 = vdwg.mxu0
        %v933 = vmax.f32 %v855, 0.0
        %v934 = vmax.f32 %v860, 0.0
        %v935 = vmax.f32 %v865, 0.0
        %v936 = vmax.f32 %v870, 0.0
        %v937 = vmax.f32 %v875, 0.0
        %v938 = vmax.f32 %v880, 0.0
        %v939 = vmax.f32 %v885, 0.0
        %v940 = vmax.f32 %v890, 0.0
        %v941 = vmax.f32 %v895, 0.0
        %v942 = vmax.f32 %v900, 0.0
        %v943 = vmax.f32 %v905, 0.0
        %v944 = vmax.f32 %v910, 0.0
        %v945 = vmax.f32 %v915, 0.0
        %v946 = vmax.f32 %v920, 0.0
        %v947 = vmax.f32 %v925, 0.0
        %v948 = vmax.f32 %v930, 0.0
        %v949 = vld [vmem:[%s5] sm:$0xff]
        %v950 = vld [vmem:[%s5 + $0x8] sm:$0xff]
        %v951 = vld [vmem:[%s5 + $0x10] sm:$0xff]
        %v952 = vld [vmem:[%s5 + $0x18] sm:$0xff]
        %v953 = vld [vmem:[%s5 + $0x20] sm:$0xff]
        %v954 = vld [vmem:[%s5 + $0x28] sm:$0xff]
        %v955 = vld [vmem:[%s5 + $0x30] sm:$0xff]
        %v956 = vld [vmem:[%s5 + $0x38] sm:$0xff]
        %v957 = vld [vmem:[%s5 + $0x40] sm:$0xff]
        %v958 = vld [vmem:[%s5 + $0x48] sm:$0xff]
        %v959 = vld [vmem:[%s5 + $0x50] sm:$0xff]
        %v960 = vld [vmem:[%s5 + $0x58] sm:$0xff]
        %v961 = vld [vmem:[%s5 + $0x60] sm:$0xff]
        %v962 = vld [vmem:[%s5 + $0x68] sm:$0xff]
        %v963 = vld [vmem:[%s5 + $0x70] sm:$0xff]
        %v964 = vld [vmem:[%s5 + $0x78] sm:$0xff]
        %v965 = vlaneseq
        %v966 = vshrl.u32 %v965, 7
        %v967 = vsub.s32 0, %v966
        %v968 = vrot.slane %v304, %v967
        %969 = vmatprep.subr.mxu0 0.0
        %970 = vmatpush1.msra.mxu0 %v949
        %971 = vmatprep.subr.mxu0 0.0
        %972 = vmatpush1.msra.mxu0 %v950
        %973 = vmatprep.subr.mxu0 0.0
        %974 = vmatpush1.msra.mxu0 %v951
        %975 = vmatprep.subr.mxu0 0.0
        %976 = vmatpush1.msra.mxu0 %v952
        %977 = vmatprep.subr.mxu0 0.0
        %978 = vmatpush1.msra.mxu0 %v953
        %979 = vmatprep.subr.mxu0 0.0
        %980 = vmatpush1.msra.mxu0 %v954
        %981 = vmatprep.subr.mxu0 0.0
        %982 = vmatpush1.msra.mxu0 %v955
        %983 = vmatprep.subr.mxu0 0.0
        %984 = vmatpush1.msra.mxu0 %v956
        %985 = vmatprep.subr.mxu0 0.0
        %986 = vmatpush1.msra.mxu0 %v957
        %987 = vmatprep.subr.mxu0 0.0
        %988 = vmatpush1.msra.mxu0 %v958
        %989 = vmatprep.subr.mxu0 0.0
        %990 = vmatpush1.msra.mxu0 %v959
        %991 = vmatprep.subr.mxu0 0.0
        %992 = vmatpush1.msra.mxu0 %v960
        %993 = vmatprep.subr.mxu0 0.0
        %994 = vmatpush1.msra.mxu0 %v961
        %995 = vmatprep.subr.mxu0 0.0
        %996 = vmatpush1.msra.mxu0 %v962
        %997 = vmatprep.subr.mxu0 0.0
        %998 = vmatpush1.msra.mxu0 %v963
        %999 = vmatprep.subr.mxu0 0.0
        %1000 = vmatpush1.msra.mxu0 %v964
        %1001 = vmatprep.subr.mxu0 0.0
        %1002 = vmatpush1.msra.mxu0 0.0
        %1003 = vmatprep.subr.mxu0 0.0
        %1004 = vmatpush1.msra.mxu0 0.0
        %1005 = vmatprep.subr.mxu0 0.0
        %1006 = vmatpush1.msra.mxu0 0.0
        %1007 = vmatprep.subr.mxu0 0.0
        %1008 = vmatpush1.msra.mxu0 0.0
        %1009 = vmatprep.subr.mxu0 0.0
        %1010 = vmatpush1.msra.mxu0 0.0
        %1011 = vmatprep.subr.mxu0 0.0
        %1012 = vmatpush1.msra.mxu0 0.0
        %1013 = vmatprep.subr.mxu0 0.0
        %1014 = vmatpush1.msra.mxu0 0.0
        %1015 = vmatprep.subr.mxu0 0.0
        %1016 = vmatpush1.msra.mxu0 0.0
        %1017 = vmatprep.subr.mxu0 0.0
        %1018 = vmatpush1.msra.mxu0 0.0
        %1019 = vmatprep.subr.mxu0 0.0
        %1020 = vmatpush1.msra.mxu0 0.0
        %1021 = vmatprep.subr.mxu0 0.0
        %1022 = vmatpush1.msra.mxu0 0.0
        %1023 = vmatprep.subr.mxu0 0.0
        %1024 = vmatpush1.msra.mxu0 0.0
        %1025 = vmatprep.subr.mxu0 0.0
        %1026 = vmatpush1.msra.mxu0 0.0
        %1027 = vmatprep.subr.mxu0 0.0
        %1028 = vmatpush1.msra.mxu0 0.0
        %1029 = vmatprep.subr.mxu0 0.0
        %1030 = vmatpush1.msra.mxu0 0.0
        %1031 = vmatprep.subr.mxu0 0.0
        %1032 = vmatpush1.msra.mxu0 0.0
        %1033 = vmatprep.mubr.f32.mxu0 0.0
        %1034 = vmatmul.mubr.f32.gmra.mrb[0].mxu0 %v933
        %v1035 = vpop.f32.mrb[0].mxu0
        %v1036 = vadd.f32 %v968, %v1035
        %v1037 = vpop.f32.mrb[0].mxu0
        %1038 = vmatprep.mubr.f32.mxu0 0.0
        %1039 = vmatmul.mubr.f32.gmra.mrb[0].mxu0 %v934
        %v1040 = vpop.f32.mrb[0].mxu0
        %v1041 = vadd.f32 %v968, %v1040
        %v1042 = vpop.f32.mrb[0].mxu0
        %1043 = vmatprep.mubr.f32.mxu0 0.0
        %1044 = vmatmul.mubr.f32.gmra.mrb[0].mxu0 %v935
        %v1045 = vpop.f32.mrb[0].mxu0
        %v1046 = vadd.f32 %v968, %v1045
        %v1047 = vpop.f32.mrb[0].mxu0
        %1048 = vmatprep.mubr.f32.mxu0 0.0
        %1049 = vmatmul.mubr.f32.gmra.mrb[0].mxu0 %v936
        %v1050 = vpop.f32.mrb[0].mxu0
        %v1051 = vadd.f32 %v968, %v1050
        %v1052 = vpop.f32.mrb[0].mxu0
        %1053 = vmatprep.mubr.f32.mxu0 0.0
        %1054 = vmatmul.mubr.f32.gmra.mrb[0].mxu0 %v937
        %v1055 = vpop.f32.mrb[0].mxu0
        %v1056 = vadd.f32 %v968, %v1055
        %v1057 = vpop.f32.mrb[0].mxu0
        %1058 = vmatprep.mubr.f32.mxu0 0.0
        %1059 = vmatmul.mubr.f32.gmra.mrb[0].mxu0 %v938
        %v1060 = vpop.f32.mrb[0].mxu0
        %v1061 = vadd.f32 %v968, %v1060
        %v1062 = vpop.f32.mrb[0].mxu0
        %1063 = vmatprep.mubr.f32.mxu0 0.0
        %1064 = vmatmul.mubr.f32.gmra.mrb[0].mxu0 %v939
        %v1065 = vpop.f32.mrb[0].mxu0
        %v1066 = vadd.f32 %v968, %v1065
        %v1067 = vpop.f32.mrb[0].mxu0
        %1068 = vmatprep.mubr.f32.mxu0 0.0
        %1069 = vmatmul.mubr.f32.gmra.mrb[0].mxu0 %v940
        %v1070 = vpop.f32.mrb[0].mxu0
        %v1071 = vadd.f32 %v968, %v1070
        %v1072 = vpop.f32.mrb[0].mxu0
        %1073 = vmatprep.mubr.f32.mxu0 0.0
        %1074 = vmatmul.mubr.f32.gmra.mrb[0].mxu0 %v941
        %v1075 = vpop.f32.mrb[0].mxu0
        %v1076 = vadd.f32 %v968, %v1075
        %v1077 = vpop.f32.mrb[0].mxu0
        %1078 = vmatprep.mubr.f32.mxu0 0.0
        %1079 = vmatmul.mubr.f32.gmra.mrb[0].mxu0 %v942
        %v1080 = vpop.f32.mrb[0].mxu0
        %v1081 = vadd.f32 %v968, %v1080
        %v1082 = vpop.f32.mrb[0].mxu0
        %1083 = vmatprep.mubr.f32.mxu0 0.0
        %1084 = vmatmul.mubr.f32.gmra.mrb[0].mxu0 %v943
        %v1085 = vpop.f32.mrb[0].mxu0
        %v1086 = vadd.f32 %v968, %v1085
        %v1087 = vpop.f32.mrb[0].mxu0
        %1088 = vmatprep.mubr.f32.mxu0 0.0
        %1089 = vmatmul.mubr.f32.gmra.mrb[0].mxu0 %v944
        %v1090 = vpop.f32.mrb[0].mxu0
        %v1091 = vadd.f32 %v968, %v1090
        %v1092 = vpop.f32.mrb[0].mxu0
        %1093 = vmatprep.mubr.f32.mxu0 0.0
        %1094 = vmatmul.mubr.f32.gmra.mrb[0].mxu0 %v945
        %v1095 = vpop.f32.mrb[0].mxu0
        %v1096 = vadd.f32 %v968, %v1095
        %v1097 = vpop.f32.mrb[0].mxu0
        %1098 = vmatprep.mubr.f32.mxu0 0.0
        %1099 = vmatmul.mubr.f32.gmra.mrb[0].mxu0 %v946
        %v1100 = vpop.f32.mrb[0].mxu0
        %v1101 = vadd.f32 %v968, %v1100
        %v1102 = vpop.f32.mrb[0].mxu0
        %1103 = vmatprep.mubr.f32.mxu0 0.0
        %1104 = vmatmul.mubr.f32.gmra.mrb[0].mxu0 %v947
        %v1105 = vpop.f32.mrb[0].mxu0
        %v1106 = vadd.f32 %v968, %v1105
        %v1107 = vpop.f32.mrb[0].mxu0
        %1108 = vmatprep.mubr.f32.mxu0 0.0
        %1109 = vmatmul.mubr.f32.gmra.mrb[0].mxu0 %v948
        %v1110 = vpop.f32.mrb[0].mxu0
        %v1111 = vadd.f32 %v968, %v1110
        %v1112 = vpop.f32.mrb[0].mxu0
        %1113 = vdwg.mxu0
        %1114 = vst [vmem:[%s288] sm:$0xff] %v1036
        %1115 = vst [vmem:[%s288 + $0x8] sm:$0xff] %v1041
        %1116 = vst [vmem:[%s288 + $0x10] sm:$0xff] %v1046
        %1117 = vst [vmem:[%s288 + $0x18] sm:$0xff] %v1051
        %1118 = vst [vmem:[%s288 + $0x20] sm:$0xff] %v1056
        %1119 = vst [vmem:[%s288 + $0x28] sm:$0xff] %v1061
        %1120 = vst [vmem:[%s288 + $0x30] sm:$0xff] %v1066
        %1121 = vst [vmem:[%s288 + $0x38] sm:$0xff] %v1071
        %1122 = vst [vmem:[%s288 + $0x40] sm:$0xff] %v1076
        %1123 = vst [vmem:[%s288 + $0x48] sm:$0xff] %v1081
        %1124 = vst [vmem:[%s288 + $0x50] sm:$0xff] %v1086
        %1125 = vst [vmem:[%s288 + $0x58] sm:$0xff] %v1091
        %1126 = vst [vmem:[%s288 + $0x60] sm:$0xff] %v1096
        %1127 = vst [vmem:[%s288 + $0x68] sm:$0xff] %v1101
        %1128 = vst [vmem:[%s288 + $0x70] sm:$0xff] %v1106
        %1129 = vst [vmem:[%s288 + $0x78] sm:$0xff] %v1111
        %s1130 = sand.u32 %s186, 1
        %s1131 = scalar_lea.sflag [#allocation3], %s1130
        %s1132 = sand.u32 %s186, 1
        %s1133 = smul.addr %s1132, 128
        %s1134 = scalar_lea.vmem [#allocation2], %s1133
        // Predicated region
        $region49: #{tpu_custom_call.1} parent=47 // pred_check
          %p1135 = pneg %p196
        $region50: #{tpu_custom_call.1} parent=47 // pred_check_branch
          %1137 = sbr.rel (%p1135) target = $region52
        $region51: #{tpu_custom_call.1} parent=47 // pred_region
          %s1138 = smul.u32 16, %s21
          %s1140 = ssub.s32 2048, 2048
          %1141 = vsyncadd %s1131, %s1140
          %s1142 = smul.addr %s1138, 128
          %s1143 = scalar_lea.hbm %s7, %s1142
          %s1144 = sshll.u32 %s1134, 4
          %s1145 = int_to_ptr.vmem [resolvable:$true] %s1144
          %1150 = dma.vmem_to_hbm [thread:$0]  %s1145, 2048, %s1143, %s1131, 128, 128, 8
        $region52: #{tpu_custom_call.1} parent=47 // pred_fallthru
          _
      $region48: #{tpu_custom_call.1} parent=5 // pred_fallthru
        _
      %p1151 = scmp.le.s32.totalorder 2, %s16
      // Predicated region
      $region53: #{tpu_custom_call.1} parent=5 // pred_check
        %p1152 = pneg %p1151
      $region54: #{tpu_custom_call.1} parent=5 // pred_check_branch
        %1154 = sbr.rel (%p1152) target = $region56
      $region55: #{tpu_custom_call.1} parent=5 // pred_region
        %s1155 = ssub.s32 %s16, 2
        // Predicated region
        $region57: #{tpu_custom_call.1} parent=55 // pred_check
          %p1156 = pneg %p202
        $region58: #{tpu_custom_call.1} parent=55 // pred_check_branch
          %1158 = sbr.rel (%p1156) target = $region60
        $region59: #{tpu_custom_call.1} parent=55 // pred_region
          %s1159 = sand.u32 %s187, 1
          %s1160 = scalar_lea.sflag [#allocation3], %s1159
          %s1161 = sand.u32 %s187, 1
          %s1162 = smul.addr %s1161, 128
          %s1163 = scalar_lea.vmem [#allocation2], %s1162
          %1164 = dma.done %s1160, 2048
        $region60: #{tpu_custom_call.1} parent=55 // pred_fallthru
          _
      $region56: #{tpu_custom_call.1} parent=5 // pred_fallthru
        _
    $region6: #{tpu_custom_call.1} parent=1 // loop_footer
      %s20 = sadd.s32 1, %s16
    $region7: #{tpu_custom_call.1} parent=1 // loop_footer_branch
      %15 = sbr.rel target = $region3
    $region8: #{tpu_custom_call.1} parent=1 // loop_exit
      _
    %1165 = vsyncpa [#allocation3], 1
    %s1166 = scalar_lea.sflag [#allocation3], 1
    %1167 = vsyncpa %s1166, 1

</llo_original>
